<compile_context>
chip_gen: v5e
topology: v5e:2x2
jax: 0.10.0
libtpu: 0.0.40
codegen_flags: <defaults>
</compile_context>

<pallas_src>
import math

import numpy as np

import jax
import jax.numpy as jnp
from jax import lax
from jax.experimental import pallas as pl
from jax.experimental.pallas import tpu as pltpu


# ---------------------------------------------------------------------------
# Activations (applied on the VPU/EUP inside the fused kernel, always in f32).
# ---------------------------------------------------------------------------
_ACTIVATIONS = {
    'relu': lambda x: jnp.maximum(x, 0.0),
    'tanh': jnp.tanh,
    'sigmoid': jax.nn.sigmoid,
    # PyTorch nn.GELU default is the exact erf form, not the tanh approximation.
    'gelu': lambda x: jax.nn.gelu(x, approximate=False),
    'identity': lambda x: x,
}


def _resolve_activation(act):
    """Accepts a name ('relu', ...), a class whose __name__ matches (e.g. nn.ReLU), or an
    elementwise jnp-compatible callable.  Instantiated torch modules are NOT supported."""
    if callable(act):
        name = getattr(act, '__name__', '').lower()
        if name in _ACTIVATIONS:
            return _ACTIVATIONS[name]
        return act
    return _ACTIVATIONS[str(act).lower()]


# ---------------------------------------------------------------------------
# Per-layer constant construction (host-side, once at init).
#   wm[kh, wi*Cin + ci, wo*Cout + co] = weight[co, ci, kh, kw]   with wi = wo + kw - p
# so   out[h, wo*Cout+co] = sum_kh (x_unpadded[h + kh - p, :] @ wm[kh])[wo*Cout+co]
# reproduces Conv2d(padding=K//2) exactly (W padding folded in, output lane-dense).
# ---------------------------------------------------------------------------
def _build_layer(weight, bias, Hin, Win, pool, pool_stride, mxu_dtype):
    Cout, Cin, K, Kw = weight.shape
    assert K == Kw, "square kernels only"
    p = K // 2
    Ho = Hin + 2 * p - K + 1
    Wo = Win + 2 * p - K + 1
    w_np = np.asarray(weight, dtype=np.float32)
    b_np = np.asarray(bias, dtype=np.float32)

    wm = np.zeros((K, Win * Cin, Wo * Cout), np.float32)
    for kh in range(K):
        for kw in range(K):
            blk = w_np[:, :, kh, kw].T                       # (Cin, Cout)
            for wo in range(Wo):
                wi = wo + kw - p
                if 0 <= wi < Win:
                    wm[kh, wi * Cin:(wi + 1) * Cin, wo * Cout:(wo + 1) * Cout] = blk
    bias_row = np.tile(b_np[None, :], (Wo, 1)).reshape(1, Wo * Cout)

    L = dict(
        Hin=Hin, Win=Win, Cin=Cin, Cout=Cout, K=K, p=p, Ho=Ho, Wo=Wo, pool=bool(pool),
        weight=jnp.asarray(w_np), bias=jnp.asarray(b_np),     # for the XLA reference
        wm=jnp.asarray(wm, dtype=mxu_dtype),
        bias_row=jnp.asarray(bias_row, dtype=jnp.float32),
    )
    if pool:
        s = pool_stride
        Hs = (Ho - 2) // s + 1
        Ws = (Wo - 2) // s + 1
        ph = np.zeros((Hs, Ho), np.float32)                   # carries the 1/4 scale
        for o in range(Hs):
            ph[o, o * s] = 0.25
            ph[o, o * s + 1] = 0.25
        pw = np.zeros((Wo * Cout, Ws * Cout), np.float32)     # 0/1 lane pool
        for o in range(Ws):
            for c in range(Cout):
                pw[(o * s) * Cout + c, o * Cout + c] = 1.0
                pw[(o * s + 1) * Cout + c, o * Cout + c] = 1.0
        L.update(Hs=Hs, Ws=Ws, ph_np=ph, pw=jnp.asarray(pw, dtype=mxu_dtype))
    else:
        L.update(Hs=Ho, Ws=Wo, ph_np=None, pw=None)
    return L


# ---------------------------------------------------------------------------
# Batch tile choice: fill the MXU M dimension (aim for Bt*H ~ 256 rows, v6e/v7x
# systolic depth) but keep >= 2 grid steps when B >= 2 so v7x's second TC gets work.
# ---------------------------------------------------------------------------
def _pick_batch_tile(B, H0):
    bt = max(1, min(B, max(1, 256 // max(H0, 1))))
    while bt > 1 and -(-B // bt) < 2:
        bt = (bt + 1) // 2
    return bt


# ---------------------------------------------------------------------------
# Fused whole-network kernel builder.
# Ref order: [x] + per-layer [wm, bias (, pw, phb)] + [pre_0..pre_{d-1}] + [xpad_0..xpad_{d-1}]
#   x      : (Bt, H0, W0*Cin0)            f32   input block (Bt images)
#   wm_i   : (K, Win*Cin, Wo*Cout)        bf16  per-kh Toeplitz weights (W-pad folded in)
#   bias_i : (1, Wo*Cout)                 f32
#   pw_i   : (Wo*Cout, Ws*Cout)           bf16  lane (W) pooling matrix
#   phb_i  : (Bt*Hs, Bt*Ho)               bf16  block-diag row (H) pooling matrix (0.25 scale)
#   pre_i  : (Bt*Ho, Wo*Cout)             f32   pre-activation conv map (row-stacked, lane-dense)
#   xpad_i : (Bt, Hin+2p, Win*Cin)        bf16  VMEM scratch: H-padded input of layer i
# ---------------------------------------------------------------------------
def _make_network_kernel(metas, Bt, act_fn, mxu_dtype):
    depth = len(metas)

    def kernel(*refs):
        it = iter(refs)
        x_ref = next(it)
        layer_in = []
        for m in metas:
            wm_ref = next(it)
            b_ref = next(it)
            pw_ref = next(it) if m['handoff_pool'] else None
            phb_ref = next(it) if m['handoff_pool'] else None
            layer_in.append((wm_ref, b_ref, pw_ref, phb_ref))
        pre_refs = [next(it) for _ in range(depth)]
        pad_refs = [next(it) for _ in range(depth)]

        cur = x_ref[...].astype(mxu_dtype)                    # (Bt, Hin, Win*Cin)

        for i, m in enumerate(metas):
            wm_ref, b_ref, pw_ref, phb_ref = layer_in[i]
            xpad = pad_refs[i]
            K, p = m['K'], m['p']
            Hin, Ho = m['Hin'], m['Ho']
            WCin = m['Win'] * m['Cin']
            WoC = m['Wo'] * m['Cout']
            Hp = Hin + 2 * p

            # H padding: zero boundary rows + interior store (lane-aligned, sublane offset p).
            if p > 0:
                zr = jnp.zeros((Bt, p, WCin), mxu_dtype)
                xpad[:, 0:p, :] = zr
                xpad[:, p + Hin:Hp, :] = zr
            xpad[:, p:p + Hin, :] = cur

            # conv = sum_kh (row-shifted slab, batch-stacked in M) @ wm[kh]   (f32 accumulate)
            acc = jnp.dot(xpad[:, 0:Ho, :].reshape(Bt * Ho, WCin), wm_ref[0],
                          preferred_element_type=jnp.float32)
            for kh in range(1, K):
                acc = acc + jnp.dot(xpad[:, kh:kh + Ho, :].reshape(Bt * Ho, WCin),
                                    wm_ref[kh], preferred_element_type=jnp.float32)

            pre = acc + b_ref[...]                            # bias epilogue (f32 VPU)
            pre_refs[i][...] = pre.astype(pre_refs[i].dtype)  # conv{i} output

            if i + 1 < depth:                                 # hand off to the next layer
                a = act_fn(pre).astype(mxu_dtype)             # activation in f32, MXU ops bf16
                if m['pool']:
                    y = jnp.dot(a, pw_ref[...],               # pool along W (lanes)
                                preferred_element_type=jnp.float32).astype(mxu_dtype)
                    y = jnp.dot(phb_ref[...], y,              # pool along H (block-diag rows)
                                preferred_element_type=jnp.float32).astype(mxu_dtype)
                    cur = y.reshape(Bt, m['Hs'], m['Ws'] * m['Cout'])
                else:
                    cur = a.reshape(Bt, Ho, WoC)
            # Last layer: its activation/pool result is never observed by forward() -> skipped.

    return kernel


# ---------------------------------------------------------------------------
# Module
# ---------------------------------------------------------------------------
class CNNFeatureExtractorPallas:
    def __init__(self, params, output_dim, input_shape=(1, 28, 28), key=None,
                 mxu_dtype=jnp.bfloat16, nchw_outputs=True):
        self.params = dict(params)
        self.input_shape = input_shape
        self.output_dim = output_dim
        self.mxu_dtype = mxu_dtype
        self.nchw_outputs = nchw_outputs
        self.act_fn = _resolve_activation(params.get('activation_function', 'relu'))
        key = jax.random.PRNGKey(42) if key is None else key

        in_ch, H, W = input_shape
        k = params['kernel_size']
        stride = params.get('pooling_stride', 2)

        self.layers = []
        for i in range(params['depth']):
            key, kw_, kb_ = jax.random.split(key, 3)
            fan_in = in_ch * k * k
            bound = 1.0 / math.sqrt(fan_in)      # PyTorch-style uniform init (deterministic key)
            w = jax.random.uniform(kw_, (params['num_channels'], in_ch, k, k),
                                   jnp.float32, -bound, bound)
            b = jax.random.uniform(kb_, (params['num_channels'],), jnp.float32,
                                   -bound, bound)
            pool = bool(params['use_pooling'] and
                        (i + 1) % params['pooling_every_n_layers'] == 0)
            L = _build_layer(w, b, H, W, pool, stride, mxu_dtype)
            self.layers.append(L)
            H, W, in_ch = L['Hs'], L['Ws'], params['num_channels']

        # Parity with calculate_to_linear_size(); the fc nn.Linear is never executed in
        # forward() (the loop breaks before it), so it is intentionally not lowered.
        self._to_linear = params['num_channels'] * H * W
        self._fwd = jax.jit(self._forward_impl)

    # ------------------------------------------------------------------ forward
    def _forward_impl(self, x_nchw):
        depth = len(self.layers)
        metas = []
        for i, L in enumerate(self.layers):
            m = dict(L)
            m['handoff_pool'] = bool(L['pool'] and (i + 1 < depth))
            metas.append(m)

        H0, W0, C0 = metas[0]['Hin'], metas[0]['Win'], metas[0]['Cin']
        B = x_nchw.shape[0]
        assert x_nchw.shape[1:] == (C0, H0, W0), "input must match input_shape"

        Bt = _pick_batch_tile(B, H0)
        nb = -(-B // Bt)
        Bpad = nb * Bt

        # Single wrapper-side relayout (NCHW -> NHWC, lane-dense flatten); everything else
        # (padding, casting, pooling, activations) happens inside the fused kernel.
        x = jnp.transpose(x_nchw, (0, 2, 3, 1)).astype(jnp.float32).reshape(B, H0, W0 * C0)
        if Bpad != B:
            x = jnp.concatenate(
                [x, jnp.zeros((Bpad - B, H0, W0 * C0), jnp.float32)], axis=0)

        args = [x]
        in_specs = [pl.BlockSpec((Bt, H0, W0 * C0), lambda b: (b, 0, 0))]
        for m in metas:
            args += [m['wm'], m['bias_row']]
            in_specs += [pl.BlockSpec(m['wm'].shape, lambda b: (0, 0, 0)),
                         pl.BlockSpec(m['bias_row'].shape, lambda b: (0, 0))]
            if m['handoff_pool']:
                phb = np.kron(np.eye(Bt, dtype=np.float32), m['ph_np'])   # block-diag H pool
                args += [m['pw'], jnp.asarray(phb, dtype=self.mxu_dtype)]
                in_specs += [pl.BlockSpec(m['pw'].shape, lambda b: (0, 0)),
                             pl.BlockSpec((Bt * m['Hs'], Bt * m['Ho']), lambda b: (0, 0))]

        out_shape = tuple(
            jax.ShapeDtypeStruct((Bpad * m['Ho'], m['Wo'] * m['Cout']), jnp.float32)
            for m in metas)
        out_specs = tuple(
            pl.BlockSpec((Bt * m['Ho'], m['Wo'] * m['Cout']), lambda b: (b, 0))
            for m in metas)
        scratch = [pltpu.VMEM((Bt, m['Hin'] + 2 * m['p'], m['Win'] * m['Cin']),
                              self.mxu_dtype) for m in metas]

        kernel = _make_network_kernel(metas, Bt, self.act_fn, self.mxu_dtype)
        pres = pl.pallas_call(
            kernel,
            out_shape=out_shape,
            grid=(nb,),
            in_specs=in_specs,
            out_specs=out_specs,
            scratch_shapes=scratch,
            compiler_params=pltpu.CompilerParams(
                dimension_semantics=("parallel",),   # >= 2 steps -> both v7x TCs busy
            ),
        )(*args)

        outputs = {}
        for i, (m, pre) in enumerate(zip(metas, pres)):
            fm = pre[:B * m['Ho']].reshape(B, m['Ho'], m['Wo'], m['Cout'])
            # NCHW presentation to match the PyTorch module (one relayout per layer); pass
            # nchw_outputs=False to keep NHWC and skip it.
            outputs[f'conv{i}'] = (jnp.transpose(fm, (0, 3, 1, 2))
                                   if self.nchw_outputs else fm)
        return outputs

    def forward(self, x_nchw):
        return self._fwd(x_nchw)

    def get_features_layers(self):
        return [f'conv{i}' for i in range(self.params['depth'])]

    # Plain-XLA f32 reference (self-check only).
    def reference_forward(self, x_nchw):
        x = jnp.transpose(x_nchw, (0, 2, 3, 1)).astype(jnp.float32)
        s = self.params.get('pooling_stride', 2)
        outs = {}
        for i, L in enumerate(self.layers):
            p = L['K'] // 2
            w_hwio = jnp.transpose(L['weight'], (2, 3, 1, 0))
            pre = lax.conv_general_dilated(
                x, w_hwio, window_strides=(1, 1), padding=((p, p), (p, p)),
                dimension_numbers=('NHWC', 'HWIO', 'NHWC'),
                precision=lax.Precision.HIGHEST) + L['bias']
            outs[f'conv{i}'] = (jnp.transpose(pre, (0, 3, 1, 2))
                                if self.nchw_outputs else pre)
            a = self.act_fn(pre)
            if L['pool']:
                a = lax.reduce_window(a, 0.0, lax.add, (1, 2, 2, 1),
                                      (1, s, s, 1), 'VALID') * 0.25
            x = a
        return outs


if __name__ == "__main__":
    params = {
        'depth': 2,
        'num_channels': 8,
        'kernel_size': 3,
        'activation_function': 'relu',    # nn.ReLU in the original module
        'use_pooling': True,
        'pooling_every_n_layers': 1,
        'pooling_stride': 2,
    }
    input_shape = (4, 16, 16)             # (C, H, W), like PyTorch's input_shape
    batch = 2

    model = CNNFeatureExtractorPallas(params, output_dim=10, input_shape=input_shape)
    x = jax.random.normal(jax.random.PRNGKey(0), (batch,) + input_shape, jnp.float32)

    outputs = model.forward(x)
    outputs = jax.block_until_ready(outputs)

    assert outputs['conv0'].shape == (batch, params['num_channels'], 16, 16)
    assert outputs['conv1'].shape == (batch, params['num_channels'], 8, 8)

    # Numerical self-check against a plain-XLA f32 reference (loose tol: bf16 MXU operands;
    # use mxu_dtype=jnp.float32 for bit-closer parity).
    ref = jax.block_until_ready(model.reference_forward(x))
    for name in ref:
        err = float(jnp.max(jnp.abs(ref[name] - outputs[name])))
        assert err < 5e-2, f"{name}: max abs err {err}"

    print("KERNEL_OK")
</pallas_src>

<mosaic_0001>
module attributes {stable_mosaic.version = 11 : i64} {
  func.func @kernel(%arg0: i32, %arg1: memref<1x16x64xf32, #tpu.memory_space<vmem>>, %arg2: memref<3x64x128xbf16, #tpu.memory_space<vmem>>, %arg3: memref<1x128xf32, #tpu.memory_space<vmem>>, %arg4: memref<128x64xbf16, #tpu.memory_space<vmem>>, %arg5: memref<8x16xbf16, #tpu.memory_space<vmem>>, %arg6: memref<3x64x64xbf16, #tpu.memory_space<vmem>>, %arg7: memref<1x64xf32, #tpu.memory_space<vmem>>, %arg8: memref<16x128xf32, #tpu.memory_space<vmem>>, %arg9: memref<8x64xf32, #tpu.memory_space<vmem>>, %arg10: memref<1x18x64xbf16, #tpu.memory_space<vmem>>, %arg11: memref<1x10x64xbf16, #tpu.memory_space<vmem>>) attributes {dimension_semantics = [#tpu.dimension_semantics<parallel>], iteration_bounds = array<i64: 2>, scalar_prefetch = 0 : i64, scratch_operands = 2 : i64, tpu.core_type = #tpu.core_type<tc>, window_params = [{transform_indices = @transform_0, window_bounds = array<i64: 1, 16, 64>}, {pipeline_mode = #tpu.pipeline_mode<synchronous>, transform_indices = @transform_1, window_bounds = array<i64: 3, 64, 128>}, {pipeline_mode = #tpu.pipeline_mode<synchronous>, transform_indices = @transform_2, window_bounds = array<i64: 1, 128>}, {pipeline_mode = #tpu.pipeline_mode<synchronous>, transform_indices = @transform_3, window_bounds = array<i64: 128, 64>}, {pipeline_mode = #tpu.pipeline_mode<synchronous>, transform_indices = @transform_4, window_bounds = array<i64: 8, 16>}, {pipeline_mode = #tpu.pipeline_mode<synchronous>, transform_indices = @transform_5, window_bounds = array<i64: 3, 64, 64>}, {pipeline_mode = #tpu.pipeline_mode<synchronous>, transform_indices = @transform_6, window_bounds = array<i64: 1, 64>}, {transform_indices = @transform_7, window_bounds = array<i64: 16, 128>}, {transform_indices = @transform_8, window_bounds = array<i64: 8, 64>}]} {
    %c0 = arith.constant 0 : index
    %c0_0 = arith.constant 0 : index
    %c0_1 = arith.constant 0 : index
    %0 = vector.load %arg1[%c0, %c0_0, %c0_1] : memref<1x16x64xf32, #tpu.memory_space<vmem>>, vector<1x16x64xf32>
    %1 = arith.truncf %0 : vector<1x16x64xf32> to vector<1x16x64xbf16>
    %cst = arith.constant 0.000000e+00 : bf16
    %2 = vector.broadcast %cst : bf16 to vector<1x1x64xbf16>
    %c0_2 = arith.constant 0 : index
    %c0_3 = arith.constant 0 : index
    %c0_4 = arith.constant 0 : index
    %3 = vector.load %arg10[%c0_2, %c0_3, %c0_4] : memref<1x18x64xbf16, #tpu.memory_space<vmem>>, vector<1x1x64xbf16>
    tpu.vector_store %arg10[%c0_2, %c0_3, %c0_4], %2 {strides = array<i32>} : memref<1x18x64xbf16, #tpu.memory_space<vmem>>, vector<1x1x64xbf16>,
    %c0_5 = arith.constant 0 : index
    %c17 = arith.constant 17 : index
    %c0_6 = arith.constant 0 : index
    %4 = vector.load %arg10[%c0_5, %c17, %c0_6] : memref<1x18x64xbf16, #tpu.memory_space<vmem>>, vector<1x1x64xbf16>
    tpu.vector_store %arg10[%c0_5, %c17, %c0_6], %2 {strides = array<i32>} : memref<1x18x64xbf16, #tpu.memory_space<vmem>>, vector<1x1x64xbf16>,
    %c0_7 = arith.constant 0 : index
    %c1 = arith.constant 1 : index
    %c0_8 = arith.constant 0 : index
    %5 = vector.load %arg10[%c0_7, %c1, %c0_8] : memref<1x18x64xbf16, #tpu.memory_space<vmem>>, vector<1x16x64xbf16>
    tpu.vector_store %arg10[%c0_7, %c1, %c0_8], %1 {strides = array<i32>} : memref<1x18x64xbf16, #tpu.memory_space<vmem>>, vector<1x16x64xbf16>,
    %c0_9 = arith.constant 0 : index
    %c0_10 = arith.constant 0 : index
    %c0_11 = arith.constant 0 : index
    %6 = vector.load %arg10[%c0_9, %c0_10, %c0_11] : memref<1x18x64xbf16, #tpu.memory_space<vmem>>, vector<1x16x64xbf16>
    %7 = vector.shape_cast %6 : vector<1x16x64xbf16> to vector<16x64xbf16>
    %c0_12 = arith.constant 0 : index
    %c0_13 = arith.constant 0 : index
    %c0_14 = arith.constant 0 : index
    %8 = vector.load %arg2[%c0_12, %c0_13, %c0_14] : memref<3x64x128xbf16, #tpu.memory_space<vmem>>, vector<1x64x128xbf16>
    %9 = vector.shape_cast %8 : vector<1x64x128xbf16> to vector<64x128xbf16>
    %cst_15 = arith.constant dense<0.000000e+00> : vector<16x128xf32>
    %10 = tpu.matmul %7, %9, %cst_15 {dimension_numbers = #tpu.dot_dimension_numbers<[1], [0], [0], [1], [0, 0, 1, 1], [], []>} : vector<16x64xbf16>, vector<64x128xbf16>, vector<16x128xf32> -> vector<16x128xf32>
    %c0_16 = arith.constant 0 : index
    %c1_17 = arith.constant 1 : index
    %c0_18 = arith.constant 0 : index
    %11 = vector.load %arg10[%c0_16, %c1_17, %c0_18] : memref<1x18x64xbf16, #tpu.memory_space<vmem>>, vector<1x16x64xbf16>
    %12 = vector.shape_cast %11 : vector<1x16x64xbf16> to vector<16x64xbf16>
    %c1_19 = arith.constant 1 : index
    %c0_20 = arith.constant 0 : index
    %c0_21 = arith.constant 0 : index
    %13 = vector.load %arg2[%c1_19, %c0_20, %c0_21] : memref<3x64x128xbf16, #tpu.memory_space<vmem>>, vector<1x64x128xbf16>
    %14 = vector.shape_cast %13 : vector<1x64x128xbf16> to vector<64x128xbf16>
    %cst_22 = arith.constant dense<0.000000e+00> : vector<16x128xf32>
    %15 = tpu.matmul %12, %14, %cst_22 {dimension_numbers = #tpu.dot_dimension_numbers<[1], [0], [0], [1], [0, 0, 1, 1], [], []>} : vector<16x64xbf16>, vector<64x128xbf16>, vector<16x128xf32> -> vector<16x128xf32>
    %16 = arith.addf %10, %15 : vector<16x128xf32>
    %c0_23 = arith.constant 0 : index
    %c2 = arith.constant 2 : index
    %c0_24 = arith.constant 0 : index
    %17 = vector.load %arg10[%c0_23, %c2, %c0_24] : memref<1x18x64xbf16, #tpu.memory_space<vmem>>, vector<1x16x64xbf16>
    %18 = vector.shape_cast %17 : vector<1x16x64xbf16> to vector<16x64xbf16>
    %c2_25 = arith.constant 2 : index
    %c0_26 = arith.constant 0 : index
    %c0_27 = arith.constant 0 : index
    %19 = vector.load %arg2[%c2_25, %c0_26, %c0_27] : memref<3x64x128xbf16, #tpu.memory_space<vmem>>, vector<1x64x128xbf16>
    %20 = vector.shape_cast %19 : vector<1x64x128xbf16> to vector<64x128xbf16>
    %cst_28 = arith.constant dense<0.000000e+00> : vector<16x128xf32>
    %21 = tpu.matmul %18, %20, %cst_28 {dimension_numbers = #tpu.dot_dimension_numbers<[1], [0], [0], [1], [0, 0, 1, 1], [], []>} : vector<16x64xbf16>, vector<64x128xbf16>, vector<16x128xf32> -> vector<16x128xf32>
    %22 = arith.addf %16, %21 : vector<16x128xf32>
    %c0_29 = arith.constant 0 : index
    %c0_30 = arith.constant 0 : index
    %23 = vector.load %arg3[%c0_29, %c0_30] : memref<1x128xf32, #tpu.memory_space<vmem>>, vector<1x128xf32>
    %24 = vector.broadcast %23 : vector<1x128xf32> to vector<16x128xf32>
    %25 = arith.addf %22, %24 : vector<16x128xf32>
    %c0_31 = arith.constant 0 : index
    %c0_32 = arith.constant 0 : index
    %26 = vector.load %arg8[%c0_31, %c0_32] : memref<16x128xf32, #tpu.memory_space<vmem>>, vector<16x128xf32>
    tpu.vector_store %arg8[%c0_31, %c0_32], %25 {strides = array<i32>} : memref<16x128xf32, #tpu.memory_space<vmem>>, vector<16x128xf32>,
    %cst_33 = arith.constant 0.000000e+00 : f32
    %27 = vector.broadcast %cst_33 : f32 to vector<16x128xf32>
    %28 = arith.maximumf %25, %27 : vector<16x128xf32>
    %29 = arith.truncf %28 : vector<16x128xf32> to vector<16x128xbf16>
    %c0_34 = arith.constant 0 : index
    %c0_35 = arith.constant 0 : index
    %30 = vector.load %arg4[%c0_34, %c0_35] : memref<128x64xbf16, #tpu.memory_space<vmem>>, vector<128x64xbf16>
    %cst_36 = arith.constant dense<0.000000e+00> : vector<16x64xf32>
    %31 = tpu.matmul %29, %30, %cst_36 {dimension_numbers = #tpu.dot_dimension_numbers<[1], [0], [0], [1], [0, 0, 1, 1], [], []>} : vector<16x128xbf16>, vector<128x64xbf16>, vector<16x64xf32> -> vector<16x64xf32>
    %32 = arith.truncf %31 : vector<16x64xf32> to vector<16x64xbf16>
    %c0_37 = arith.constant 0 : index
    %c0_38 = arith.constant 0 : index
    %33 = vector.load %arg5[%c0_37, %c0_38] : memref<8x16xbf16, #tpu.memory_space<vmem>>, vector<8x16xbf16>
    %cst_39 = arith.constant dense<0.000000e+00> : vector<8x64xf32>
    %34 = tpu.matmul %33, %32, %cst_39 {dimension_numbers = #tpu.dot_dimension_numbers<[1], [0], [0], [1], [0, 0, 1, 1], [], []>} : vector<8x16xbf16>, vector<16x64xbf16>, vector<8x64xf32> -> vector<8x64xf32>
    %35 = arith.truncf %34 : vector<8x64xf32> to vector<8x64xbf16>
    %36 = vector.shape_cast %35 : vector<8x64xbf16> to vector<1x8x64xbf16>
    %cst_40 = arith.constant 0.000000e+00 : bf16
    %37 = vector.broadcast %cst_40 : bf16 to vector<1x1x64xbf16>
    %c0_41 = arith.constant 0 : index
    %c0_42 = arith.constant 0 : index
    %c0_43 = arith.constant 0 : index
    %38 = vector.load %arg11[%c0_41, %c0_42, %c0_43] : memref<1x10x64xbf16, #tpu.memory_space<vmem>>, vector<1x1x64xbf16>
    tpu.vector_store %arg11[%c0_41, %c0_42, %c0_43], %37 {strides = array<i32>} : memref<1x10x64xbf16, #tpu.memory_space<vmem>>, vector<1x1x64xbf16>,
    %c0_44 = arith.constant 0 : index
    %c9 = arith.constant 9 : index
    %c0_45 = arith.constant 0 : index
    %39 = vector.load %arg11[%c0_44, %c9, %c0_45] : memref<1x10x64xbf16, #tpu.memory_space<vmem>>, vector<1x1x64xbf16>
    tpu.vector_store %arg11[%c0_44, %c9, %c0_45], %37 {strides = array<i32>} : memref<1x10x64xbf16, #tpu.memory_space<vmem>>, vector<1x1x64xbf16>,
    %c0_46 = arith.constant 0 : index
    %c1_47 = arith.constant 1 : index
    %c0_48 = arith.constant 0 : index
    %40 = vector.load %arg11[%c0_46, %c1_47, %c0_48] : memref<1x10x64xbf16, #tpu.memory_space<vmem>>, vector<1x8x64xbf16>
    tpu.vector_store %arg11[%c0_46, %c1_47, %c0_48], %36 {strides = array<i32>} : memref<1x10x64xbf16, #tpu.memory_space<vmem>>, vector<1x8x64xbf16>,
    %c0_49 = arith.constant 0 : index
    %c0_50 = arith.constant 0 : index
    %c0_51 = arith.constant 0 : index
    %41 = vector.load %arg11[%c0_49, %c0_50, %c0_51] : memref<1x10x64xbf16, #tpu.memory_space<vmem>>, vector<1x8x64xbf16>
    %42 = vector.shape_cast %41 : vector<1x8x64xbf16> to vector<8x64xbf16>
    %c0_52 = arith.constant 0 : index
    %c0_53 = arith.constant 0 : index
    %c0_54 = arith.constant 0 : index
    %43 = vector.load %arg6[%c0_52, %c0_53, %c0_54] : memref<3x64x64xbf16, #tpu.memory_space<vmem>>, vector<1x64x64xbf16>
    %44 = vector.shape_cast %43 : vector<1x64x64xbf16> to vector<64x64xbf16>
    %cst_55 = arith.constant dense<0.000000e+00> : vector<8x64xf32>
    %45 = tpu.matmul %42, %44, %cst_55 {dimension_numbers = #tpu.dot_dimension_numbers<[1], [0], [0], [1], [0, 0, 1, 1], [], []>} : vector<8x64xbf16>, vector<64x64xbf16>, vector<8x64xf32> -> vector<8x64xf32>
    %c0_56 = arith.constant 0 : index
    %c1_57 = arith.constant 1 : index
    %c0_58 = arith.constant 0 : index
    %46 = vector.load %arg11[%c0_56, %c1_57, %c0_58] : memref<1x10x64xbf16, #tpu.memory_space<vmem>>, vector<1x8x64xbf16>
    %47 = vector.shape_cast %46 : vector<1x8x64xbf16> to vector<8x64xbf16>
    %c1_59 = arith.constant 1 : index
    %c0_60 = arith.constant 0 : index
    %c0_61 = arith.constant 0 : index
    %48 = vector.load %arg6[%c1_59, %c0_60, %c0_61] : memref<3x64x64xbf16, #tpu.memory_space<vmem>>, vector<1x64x64xbf16>
    %49 = vector.shape_cast %48 : vector<1x64x64xbf16> to vector<64x64xbf16>
    %cst_62 = arith.constant dense<0.000000e+00> : vector<8x64xf32>
    %50 = tpu.matmul %47, %49, %cst_62 {dimension_numbers = #tpu.dot_dimension_numbers<[1], [0], [0], [1], [0, 0, 1, 1], [], []>} : vector<8x64xbf16>, vector<64x64xbf16>, vector<8x64xf32> -> vector<8x64xf32>
    %51 = arith.addf %45, %50 : vector<8x64xf32>
    %c0_63 = arith.constant 0 : index
    %c2_64 = arith.constant 2 : index
    %c0_65 = arith.constant 0 : index
    %52 = vector.load %arg11[%c0_63, %c2_64, %c0_65] : memref<1x10x64xbf16, #tpu.memory_space<vmem>>, vector<1x8x64xbf16>
    %53 = vector.shape_cast %52 : vector<1x8x64xbf16> to vector<8x64xbf16>
    %c2_66 = arith.constant 2 : index
    %c0_67 = arith.constant 0 : index
    %c0_68 = arith.constant 0 : index
    %54 = vector.load %arg6[%c2_66, %c0_67, %c0_68] : memref<3x64x64xbf16, #tpu.memory_space<vmem>>, vector<1x64x64xbf16>
    %55 = vector.shape_cast %54 : vector<1x64x64xbf16> to vector<64x64xbf16>
    %cst_69 = arith.constant dense<0.000000e+00> : vector<8x64xf32>
    %56 = tpu.matmul %53, %55, %cst_69 {dimension_numbers = #tpu.dot_dimension_numbers<[1], [0], [0], [1], [0, 0, 1, 1], [], []>} : vector<8x64xbf16>, vector<64x64xbf16>, vector<8x64xf32> -> vector<8x64xf32>
    %57 = arith.addf %51, %56 : vector<8x64xf32>
    %c0_70 = arith.constant 0 : index
    %c0_71 = arith.constant 0 : index
    %58 = vector.load %arg7[%c0_70, %c0_71] : memref<1x64xf32, #tpu.memory_space<vmem>>, vector<1x64xf32>
    %59 = vector.broadcast %58 : vector<1x64xf32> to vector<8x64xf32>
    %60 = arith.addf %57, %59 : vector<8x64xf32>
    %c0_72 = arith.constant 0 : index
    %c0_73 = arith.constant 0 : index
    %61 = vector.load %arg9[%c0_72, %c0_73] : memref<8x64xf32, #tpu.memory_space<vmem>>, vector<8x64xf32>
    tpu.vector_store %arg9[%c0_72, %c0_73], %60 {strides = array<i32>} : memref<8x64xf32, #tpu.memory_space<vmem>>, vector<8x64xf32>,
    return
  }
  func.func @transform_0(%arg0: i32) -> (i32, i32, i32) {
    %c0_i32 = arith.constant 0 : i32
    %c0_i32_0 = arith.constant 0 : i32
    %c0_i32_1 = arith.constant 0 : i32
    return %arg0, %c0_i32, %c0_i32_0 : i32, i32, i32
  }
  func.func @transform_1(%arg0: i32) -> (i32, i32, i32) {
    %c0_i32 = arith.constant 0 : i32
    %c0_i32_0 = arith.constant 0 : i32
    %c0_i32_1 = arith.constant 0 : i32
    %c0_i32_2 = arith.constant 0 : i32
    return %c0_i32, %c0_i32_0, %c0_i32_1 : i32, i32, i32
  }
  func.func @transform_2(%arg0: i32) -> (i32, i32) {
    %c0_i32 = arith.constant 0 : i32
    %c0_i32_0 = arith.constant 0 : i32
    %c0_i32_1 = arith.constant 0 : i32
    return %c0_i32, %c0_i32_0 : i32, i32
  }
  func.func @transform_3(%arg0: i32) -> (i32, i32) {
    %c0_i32 = arith.constant 0 : i32
    %c0_i32_0 = arith.constant 0 : i32
    %c0_i32_1 = arith.constant 0 : i32
    return %c0_i32, %c0_i32_0 : i32, i32
  }
  func.func @transform_4(%arg0: i32) -> (i32, i32) {
    %c0_i32 = arith.constant 0 : i32
    %c0_i32_0 = arith.constant 0 : i32
    %c0_i32_1 = arith.constant 0 : i32
    return %c0_i32, %c0_i32_0 : i32, i32
  }
  func.func @transform_5(%arg0: i32) -> (i32, i32, i32) {
    %c0_i32 = arith.constant 0 : i32
    %c0_i32_0 = arith.constant 0 : i32
    %c0_i32_1 = arith.constant 0 : i32
    %c0_i32_2 = arith.constant 0 : i32
    return %c0_i32, %c0_i32_0, %c0_i32_1 : i32, i32, i32
  }
  func.func @transform_6(%arg0: i32) -> (i32, i32) {
    %c0_i32 = arith.constant 0 : i32
    %c0_i32_0 = arith.constant 0 : i32
    %c0_i32_1 = arith.constant 0 : i32
    return %c0_i32, %c0_i32_0 : i32, i32
  }
  func.func @transform_7(%arg0: i32) -> (i32, i32) {
    %c0_i32 = arith.constant 0 : i32
    %c0_i32_0 = arith.constant 0 : i32
    return %arg0, %c0_i32 : i32, i32
  }
  func.func @transform_8(%arg0: i32) -> (i32, i32) {
    %c0_i32 = arith.constant 0 : i32
    %c0_i32_0 = arith.constant 0 : i32
    return %arg0, %c0_i32 : i32, i32
  }
}

</mosaic_0001>

<llo_original>
// kernel: _forward_impl.1
$region0: #{_forward_impl.1}
  #allocation0 [shape = 'u32[]', space=smem, size = 0x4, offset = 0x4, fixed_abs, tag = 'smem constant byte address 0x4 - core index']
  #allocation1 [shape = 'u32[72,128]{1,0:T(1,128)}', space=vmem, size = 0x9000, scoped, tag = 'internal scratch']
  #allocation2 [shape = 'bf16[1,18,64]{2,1,0:T(8,128)(2,1)}', space=vmem, size = 0x1800, scoped, tag = 'scratch operand']
  #allocation3 [shape = 'bf16[1,10,64]{2,1,0:T(8,128)(2,1)}', space=vmem, size = 0x1000, scoped, tag = 'scratch operand']
  %s0 = inlined_call_operand.vmem [shape: f32[2,16,64], index: 0, kind: input, shape index: {}]
  %s1 = inlined_call_operand.vmem [shape: bf16[3,64,128], index: 1, kind: input, shape index: {}]
  %s2 = inlined_call_operand.vmem [shape: f32[1,128], index: 2, kind: input, shape index: {}]
  %s3 = inlined_call_operand.vmem [shape: bf16[128,64], index: 3, kind: input, shape index: {}]
  %s4 = inlined_call_operand.vmem [shape: bf16[8,16], index: 4, kind: input, shape index: {}]
  %s5 = inlined_call_operand.vmem [shape: bf16[3,64,64], index: 5, kind: input, shape index: {}]
  %s6 = inlined_call_operand.vmem [shape: f32[1,64], index: 6, kind: input, shape index: {}]
  %s7 = inlined_call_operand.vmem [shape: f32[32,128], index: 7, kind: output, shape index: {0}]
  %s8 = inlined_call_operand.vmem [shape: f32[16,64], index: 8, kind: output, shape index: {1}]
  %9 = xla_tuple %s7, %s8
  %s10 = sld [smem:[#allocation0]]
  $region69: #{_forward_impl.1} parent=0
    _
  %s12 = ssub.s32 1, %s10
  %s13 = scalar_select 0, %s12, %s10
  loop: start=0, step=1, limit=4
  $region2: #{_forward_impl.1} parent=0 // loop_pre_header
    _
  $region3: #{_forward_impl.1} parent=0 // loop_header
    %s15 = sphi 0, %s19
    %p16 = scmp.ge.s32.totalorder %s15, 4
    %s25 = sphi 0, %s27
    %s28 = sphi 0, %s25
    %s29 = sphi 0, %s28
    %s45 = sphi 0, %s29
    %s49 = sphi 0, %s49
    %s51 = sphi 0, %s49
    %s52 = sphi 0, %s51
    %s66 = sphi 0, %s52
    %s70 = sphi 0, %s70
    %s72 = sphi 0, %s70
    %s73 = sphi 0, %s72
    %s87 = sphi 0, %s73
    %s91 = sphi 0, %s91
    %s93 = sphi 0, %s91
    %s94 = sphi 0, %s93
    %s108 = sphi 0, %s94
    %s112 = sphi 0, %s112
    %s114 = sphi 0, %s112
    %s115 = sphi 0, %s114
    %s129 = sphi 0, %s115
    %s133 = sphi 0, %s133
    %s135 = sphi 0, %s133
    %s136 = sphi 0, %s135
    %s150 = sphi 0, %s136
    %s154 = sphi 0, %s154
    %s156 = sphi 0, %s154
    %s157 = sphi 0, %s156
    %s171 = sphi 0, %s157
    %s177 = sphi 0, %s179
    %s180 = sphi 0, %s177
    %s181 = sphi 0, %s180
    %s197 = sphi 0, %s181
    %s203 = sphi 0, %s205
    %s206 = sphi 0, %s203
    %s207 = sphi 0, %s206
    %s223 = sphi 0, %s207
  $region4: #{_forward_impl.1} parent=0 // loop_header_branch
    %18 = sbr.rel (%p16) target = $region8
  $region5: #{_forward_impl.1} parent=0 // loop_body
    %s20 = ssub.s32 %s15, 1
    %s21 = ssub.s32 %s15, 2
    %s22 = sadd.s32 %s15, 1
    %s23 = ssub.s32 %s15, %s22
    %p24 = scmp.eq.s32.totalorder %s23, 0
    %s26 = sadd.s32 %s25, 1
    %s27 = scalar_select %p24, %s25, %s26
    %p30 = pneg %p24
    %p31 = scmp.eq.s32.totalorder %s15, 1
    %p32 = por %p30, %p31
    %p33 = scmp.ne.s32.totalorder %s25, %s28
    %p34 = scmp.eq.s32.totalorder %s15, 0
    %p35 = por %p33, %p34
    %p36 = scmp.ne.s32.totalorder %s25, %s28
    %p37 = scmp.eq.s32.totalorder %s20, 1
    %p38 = por %p36, %p37
    %p39 = scmp.ne.s32.totalorder %s28, %s29
    %p40 = scmp.eq.s32.totalorder %s20, 0
    %p41 = por %p39, %p40
    %p42 = scmp.ne.s32.totalorder %s28, %s29
    %p43 = scmp.eq.s32.totalorder %s21, 1
    %p44 = por %p42, %p43
    %p46 = scmp.ne.s32.totalorder %s29, %s45
    %p47 = scmp.eq.s32.totalorder %s21, 0
    %p48 = por %p46, %p47
    %s50 = sadd.s32 %s49, 1
    %p53 = scmp.eq.s32.totalorder %s15, 1
    %p54 = scmp.ne.s32.totalorder %s49, %s51
    %p55 = scmp.eq.s32.totalorder %s15, 0
    %p56 = por %p54, %p55
    %p57 = scmp.ne.s32.totalorder %s49, %s51
    %p58 = scmp.eq.s32.totalorder %s20, 1
    %p59 = por %p57, %p58
    %p60 = scmp.ne.s32.totalorder %s51, %s52
    %p61 = scmp.eq.s32.totalorder %s20, 0
    %p62 = por %p60, %p61
    %p63 = scmp.ne.s32.totalorder %s51, %s52
    %p64 = scmp.eq.s32.totalorder %s21, 1
    %p65 = por %p63, %p64
    %p67 = scmp.ne.s32.totalorder %s52, %s66
    %p68 = scmp.eq.s32.totalorder %s21, 0
    %p69 = por %p67, %p68
    %s71 = sadd.s32 %s70, 1
    %p74 = scmp.eq.s32.totalorder %s15, 1
    %p75 = scmp.ne.s32.totalorder %s70, %s72
    %p76 = scmp.eq.s32.totalorder %s15, 0
    %p77 = por %p75, %p76
    %p78 = scmp.ne.s32.totalorder %s70, %s72
    %p79 = scmp.eq.s32.totalorder %s20, 1
    %p80 = por %p78, %p79
    %p81 = scmp.ne.s32.totalorder %s72, %s73
    %p82 = scmp.eq.s32.totalorder %s20, 0
    %p83 = por %p81, %p82
    %p84 = scmp.ne.s32.totalorder %s72, %s73
    %p85 = scmp.eq.s32.totalorder %s21, 1
    %p86 = por %p84, %p85
    %p88 = scmp.ne.s32.totalorder %s73, %s87
    %p89 = scmp.eq.s32.totalorder %s21, 0
    %p90 = por %p88, %p89
    %s92 = sadd.s32 %s91, 1
    %p95 = scmp.eq.s32.totalorder %s15, 1
    %p96 = scmp.ne.s32.totalorder %s91, %s93
    %p97 = scmp.eq.s32.totalorder %s15, 0
    %p98 = por %p96, %p97
    %p99 = scmp.ne.s32.totalorder %s91, %s93
    %p100 = scmp.eq.s32.totalorder %s20, 1
    %p101 = por %p99, %p100
    %p102 = scmp.ne.s32.totalorder %s93, %s94
    %p103 = scmp.eq.s32.totalorder %s20, 0
    %p104 = por %p102, %p103
    %p105 = scmp.ne.s32.totalorder %s93, %s94
    %p106 = scmp.eq.s32.totalorder %s21, 1
    %p107 = por %p105, %p106
    %p109 = scmp.ne.s32.totalorder %s94, %s108
    %p110 = scmp.eq.s32.totalorder %s21, 0
    %p111 = por %p109, %p110
    %s113 = sadd.s32 %s112, 1
    %p116 = scmp.eq.s32.totalorder %s15, 1
    %p117 = scmp.ne.s32.totalorder %s112, %s114
    %p118 = scmp.eq.s32.totalorder %s15, 0
    %p119 = por %p117, %p118
    %p120 = scmp.ne.s32.totalorder %s112, %s114
    %p121 = scmp.eq.s32.totalorder %s20, 1
    %p122 = por %p120, %p121
    %p123 = scmp.ne.s32.totalorder %s114, %s115
    %p124 = scmp.eq.s32.totalorder %s20, 0
    %p125 = por %p123, %p124
    %p126 = scmp.ne.s32.totalorder %s114, %s115
    %p127 = scmp.eq.s32.totalorder %s21, 1
    %p128 = por %p126, %p127
    %p130 = scmp.ne.s32.totalorder %s115, %s129
    %p131 = scmp.eq.s32.totalorder %s21, 0
    %p132 = por %p130, %p131
    %s134 = sadd.s32 %s133, 1
    %p137 = scmp.eq.s32.totalorder %s15, 1
    %p138 = scmp.ne.s32.totalorder %s133, %s135
    %p139 = scmp.eq.s32.totalorder %s15, 0
    %p140 = por %p138, %p139
    %p141 = scmp.ne.s32.totalorder %s133, %s135
    %p142 = scmp.eq.s32.totalorder %s20, 1
    %p143 = por %p141, %p142
    %p144 = scmp.ne.s32.totalorder %s135, %s136
    %p145 = scmp.eq.s32.totalorder %s20, 0
    %p146 = por %p144, %p145
    %p147 = scmp.ne.s32.totalorder %s135, %s136
    %p148 = scmp.eq.s32.totalorder %s21, 1
    %p149 = por %p147, %p148
    %p151 = scmp.ne.s32.totalorder %s136, %s150
    %p152 = scmp.eq.s32.totalorder %s21, 0
    %p153 = por %p151, %p152
    %s155 = sadd.s32 %s154, 1
    %p158 = scmp.eq.s32.totalorder %s15, 1
    %p159 = scmp.ne.s32.totalorder %s154, %s156
    %p160 = scmp.eq.s32.totalorder %s15, 0
    %p161 = por %p159, %p160
    %p162 = scmp.ne.s32.totalorder %s154, %s156
    %p163 = scmp.eq.s32.totalorder %s20, 1
    %p164 = por %p162, %p163
    %p165 = scmp.ne.s32.totalorder %s156, %s157
    %p166 = scmp.eq.s32.totalorder %s20, 0
    %p167 = por %p165, %p166
    %p168 = scmp.ne.s32.totalorder %s156, %s157
    %p169 = scmp.eq.s32.totalorder %s21, 1
    %p170 = por %p168, %p169
    %p172 = scmp.ne.s32.totalorder %s157, %s171
    %p173 = scmp.eq.s32.totalorder %s21, 0
    %p174 = por %p172, %p173
    %s175 = ssub.s32 %s15, %s22
    %p176 = scmp.eq.s32.totalorder %s175, 0
    %s178 = sadd.s32 %s177, 1
    %s179 = scalar_select %p176, %s177, %s178
    %p182 = pneg %p176
    %p183 = scmp.eq.s32.totalorder %s15, 1
    %p184 = por %p182, %p183
    %p185 = scmp.ne.s32.totalorder %s177, %s180
    %p186 = scmp.eq.s32.totalorder %s15, 0
    %p187 = por %p185, %p186
    %p188 = scmp.ne.s32.totalorder %s177, %s180
    %p189 = scmp.eq.s32.totalorder %s20, 1
    %p190 = por %p188, %p189
    %p191 = scmp.ne.s32.totalorder %s180, %s181
    %p192 = scmp.eq.s32.totalorder %s20, 0
    %p193 = por %p191, %p192
    %p194 = scmp.ne.s32.totalorder %s180, %s181
    %p195 = scmp.eq.s32.totalorder %s21, 1
    %p196 = por %p194, %p195
    %p198 = scmp.ne.s32.totalorder %s181, %s197
    %p199 = scmp.eq.s32.totalorder %s21, 0
    %p200 = por %p198, %p199
    %s201 = ssub.s32 %s15, %s22
    %p202 = scmp.eq.s32.totalorder %s201, 0
    %s204 = sadd.s32 %s203, 1
    %s205 = scalar_select %p202, %s203, %s204
    %p208 = pneg %p202
    %p209 = scmp.eq.s32.totalorder %s15, 1
    %p210 = por %p208, %p209
    %p211 = scmp.ne.s32.totalorder %s203, %s206
    %p212 = scmp.eq.s32.totalorder %s15, 0
    %p213 = por %p211, %p212
    %p214 = scmp.ne.s32.totalorder %s203, %s206
    %p215 = scmp.eq.s32.totalorder %s20, 1
    %p216 = por %p214, %p215
    %p217 = scmp.ne.s32.totalorder %s206, %s207
    %p218 = scmp.eq.s32.totalorder %s20, 0
    %p219 = por %p217, %p218
    %p220 = scmp.ne.s32.totalorder %s206, %s207
    %p221 = scmp.eq.s32.totalorder %s21, 1
    %p222 = por %p220, %p221
    %p224 = scmp.ne.s32.totalorder %s207, %s223
    %p225 = scmp.eq.s32.totalorder %s21, 0
    %p226 = por %p224, %p225
    %p227 = scmp.le.s32.totalorder 1, %s15
    %p228 = scmp.lt.s32.totalorder %s15, 3
    %p229 = pnand %p227, %p228
    %p230 = pneg %p229
    // Predicated region
    $region9: #{_forward_impl.1} parent=5 // pred_check
      _
    $region10: #{_forward_impl.1} parent=5 // pred_check_branch
      %232 = sbr.rel (%p229) target = $region12
    $region11: #{_forward_impl.1} parent=5 // pred_region
      %s233 = ssub.s32 %s15, 1
      // Predicated region
      $region13: #{_forward_impl.1} parent=11 // pred_check
        %p234 = pneg %p62
      $region14: #{_forward_impl.1} parent=11 // pred_check_branch
        %236 = sbr.rel (%p234) target = $region16
      $region15: #{_forward_impl.1} parent=11 // pred_region
        _
      $region16: #{_forward_impl.1} parent=11 // pred_fallthru
        _
      // Predicated region
      $region17: #{_forward_impl.1} parent=11 // pred_check
        %p237 = pneg %p83
      $region18: #{_forward_impl.1} parent=11 // pred_check_branch
        %239 = sbr.rel (%p237) target = $region20
      $region19: #{_forward_impl.1} parent=11 // pred_region
        _
      $region20: #{_forward_impl.1} parent=11 // pred_fallthru
        _
      // Predicated region
      $region21: #{_forward_impl.1} parent=11 // pred_check
        %p240 = pneg %p104
      $region22: #{_forward_impl.1} parent=11 // pred_check_branch
        %242 = sbr.rel (%p240) target = $region24
      $region23: #{_forward_impl.1} parent=11 // pred_region
        _
      $region24: #{_forward_impl.1} parent=11 // pred_fallthru
        _
      // Predicated region
      $region25: #{_forward_impl.1} parent=11 // pred_check
        %p243 = pneg %p125
      $region26: #{_forward_impl.1} parent=11 // pred_check_branch
        %245 = sbr.rel (%p243) target = $region28
      $region27: #{_forward_impl.1} parent=11 // pred_region
        _
      $region28: #{_forward_impl.1} parent=11 // pred_fallthru
        _
      // Predicated region
      $region29: #{_forward_impl.1} parent=11 // pred_check
        %p246 = pneg %p146
      $region30: #{_forward_impl.1} parent=11 // pred_check_branch
        %248 = sbr.rel (%p246) target = $region32
      $region31: #{_forward_impl.1} parent=11 // pred_region
        _
      $region32: #{_forward_impl.1} parent=11 // pred_fallthru
        _
      // Predicated region
      $region33: #{_forward_impl.1} parent=11 // pred_check
        %p249 = pneg %p167
      $region34: #{_forward_impl.1} parent=11 // pred_check_branch
        %251 = sbr.rel (%p249) target = $region36
      $region35: #{_forward_impl.1} parent=11 // pred_region
        _
      $region36: #{_forward_impl.1} parent=11 // pred_fallthru
        _
    $region12: #{_forward_impl.1} parent=5 // pred_fallthru
      _
    %p252 = scmp.lt.s32.totalorder %s15, 2
    // Predicated region
    $region37: #{_forward_impl.1} parent=5 // pred_check
      %p253 = pneg %p252
    $region38: #{_forward_impl.1} parent=5 // pred_check_branch
      %255 = sbr.rel (%p253) target = $region40
    $region39: #{_forward_impl.1} parent=5 // pred_region
      // Predicated region
      $region41: #{_forward_impl.1} parent=39 // pred_check
        %p256 = pneg %p35
      $region42: #{_forward_impl.1} parent=39 // pred_check_branch
        %258 = sbr.rel (%p256) target = $region44
      $region43: #{_forward_impl.1} parent=39 // pred_region
        %p259 = scmp.lt.s32.totalorder %s15, 1
        %s260 = scalar_select %p259, %s15, 1
        %s261 = smul.addr %s260, 2
        %s262 = smul.addr %s261, 8
        %s263 = scalar_lea.vmem %s0, %s262
      $region44: #{_forward_impl.1} parent=39 // pred_fallthru
        _
    $region40: #{_forward_impl.1} parent=5 // pred_fallthru
      _
    %p264 = scmp.le.s32.totalorder 1, %s15
    %p265 = scmp.lt.s32.totalorder %s15, 3
    %p266 = pnand %p264, %p265
    %p267 = pneg %p266
    // Predicated region
    $region45: #{_forward_impl.1} parent=5 // pred_check
      _
    $region46: #{_forward_impl.1} parent=5 // pred_check_branch
      %269 = sbr.rel (%p266) target = $region48
    $region47: #{_forward_impl.1} parent=5 // pred_region
      %s270 = ssub.s32 %s15, 1
      %p271 = scmp.lt.s32.totalorder %s20, 1
      %s272 = scalar_select %p271, %s20, 1
      %s273 = smul.addr %s272, 2
      %s274 = smul.addr %s273, 8
      %s275 = scalar_lea.vmem %s0, %s274
      %p276 = pneg %p41
      %p277 = pneg %p38
      %p278 = pneg %p62
      %p279 = pneg %p59
      %p280 = pneg %p83
      %p281 = pneg %p80
      %p282 = pneg %p104
      %p283 = pneg %p101
      %p284 = pneg %p125
      %p285 = pneg %p122
      %p286 = pneg %p146
      %p287 = pneg %p143
      %p288 = pneg %p167
      %p289 = pneg %p164
      %p290 = pneg %p193
      %p291 = pneg %p190
      %s292 = smul.u32 2, %s20
      %p293 = scmp.lt.s32.totalorder %s292, 3
      %s294 = scalar_select %p293, %s292, 3
      %s295 = smul.addr %s294, 8
      %s296 = scalar_lea.vmem %s7, %s295
      %p297 = pneg %p219
      %p298 = pneg %p216
      %p299 = scmp.lt.s32.totalorder %s20, 1
      %s300 = scalar_select %p299, %s20, 1
      %s301 = smul.addr %s300, 8
      %s302 = scalar_lea.vmem %s8, %s301
      %p303 = scmp.lt.s32.totalorder %s20, 1
      %s304 = scalar_select %p303, %s20, 1
      %s305 = smul.addr %s304, 2
      %s306 = smul.addr %s305, 8
      %s307 = scalar_lea.vmem %s0, %s306
      %s308 = smul.u32 2, %s20
      %p309 = scmp.lt.s32.totalorder %s308, 3
      %s310 = scalar_select %p309, %s308, 3
      %s311 = smul.addr %s310, 8
      %s312 = scalar_lea.vmem %s7, %s311
      %s313 = smul.u32 2, %s20
      %p314 = scmp.lt.s32.totalorder %s20, 1
      %s315 = scalar_select %p314, %s20, 1
      %s316 = smul.addr %s315, 8
      %s317 = scalar_lea.vmem %s8, %s316
      %v319 = vld [vmem:[%s307] sm:$0xff]
      %v320 = vld [vmem:[%s307 + $0x8] sm:$0xff]
      %v321 = vpack.c.bf16 %v319, %v319
      %v322 = vpack.c.bf16 %v320, %v320
      %vm323 = vcmask 516096
      %vm324 = vsmask.f32 256
      %vm325 = vmand %vm323, %vm324
      %v326 = vld [vmem:[#allocation2] sm:$0x1]
      %v327 = vsel %vm325, 0, %v326
      %328 = vst [vmem:[#allocation2] sm:$0x1] %v327
      %vm329 = vsmask.f32 7938
      %vm330 = vmand %vm323, %vm329
      %v331 = vld [vmem:[#allocation2 + $0x8] sm:$0x1]
      %v332 = vsel %vm330, 0, %v331
      %333 = vst [vmem:[#allocation2 + $0x8] sm:$0x1] %v332
      %vm334 = vsmask.f32 4368
      %vm335 = vmor %vm324, %vm334
      %v337 = vshrl.u32 %v321, 16
      %v339 = vrot.slane %v337, 7
      %v340 = vshll.u32 %v321, 16
      %v342 = vor.u32 %v339, %v340
      %v343 = vrot.slane %v339, 4
      %v345 = vshrl.u32 %v322, 16
      %v347 = vrot.slane %v345, 7
      %v348 = vshll.u32 %v322, 16
      %v350 = vor.u32 %v347, %v348
      %v351 = vsel %vm335, %v343, %v350
      %v352 = vrot.slane %v347, 4
      %vm356 = vcmask 519168
      %vm357 = vmand %vm356, %vm329
      %v358 = vld [vmem:[#allocation2] sm:$0xf]
      %v359 = vsel %vm357, %v342, %v358
      %360 = vst [vmem:[#allocation2] sm:$0xf] %v359
      %vm361 = vcmask 519168
      %362 = vst.msk [vmem:[#allocation2 + $0x4] sm:$0xf] %vm361, %v351
      %v363 = vld [vmem:[#allocation2 + $0x8] sm:$0x1]
      %v364 = vsel %vm325, %v352, %v363
      %365 = vst [vmem:[#allocation2 + $0x8] sm:$0x1] %v364
      %v366 = vld [vmem:[#allocation2] sm:$0xf]
      %v367 = vld [vmem:[#allocation2 + $0x4] sm:$0xf]
      %v368 = vld [vmem:[%s1] sm:$0xf]
      %v369 = vld [vmem:[%s1 + $0x4] sm:$0xf]
      %v370 = vld [vmem:[%s1 + $0x8] sm:$0xf]
      %v371 = vld [vmem:[%s1 + $0xc] sm:$0xf]
      %v372 = vld [vmem:[%s1 + $0x10] sm:$0xf]
      %v373 = vld [vmem:[%s1 + $0x14] sm:$0xf]
      %v374 = vld [vmem:[%s1 + $0x18] sm:$0xf]
      %v375 = vld [vmem:[%s1 + $0x1c] sm:$0xf]
      %v376 = vld [vmem:[#allocation2 + $0x8] sm:$0x1]
      %s377 = scalar_lea.vmem %s1, 32
      %v378 = vld [vmem:[%s377] sm:$0xf]
      %v379 = vld [vmem:[%s377 + $0x4] sm:$0xf]
      %v380 = vld [vmem:[%s377 + $0x8] sm:$0xf]
      %v381 = vld [vmem:[%s377 + $0xc] sm:$0xf]
      %v382 = vld [vmem:[%s377 + $0x10] sm:$0xf]
      %v383 = vld [vmem:[%s377 + $0x14] sm:$0xf]
      %v384 = vld [vmem:[%s377 + $0x18] sm:$0xf]
      %v385 = vld [vmem:[%s377 + $0x1c] sm:$0xf]
      %v389 = vunpack.c.l.b16 %v366
      %v390 = vunpack.c.l.b16 %v367
      %v391 = vunpack.c.l.b16 %v376
      %v392 = vpack.c.b16 %v390, %v389
      %v393 = vpack.c.b16 %v391, %v391
      %vm394 = vsmask.f32 7424
      %v396 = vshrl.u32 %v392, 16
      %v398 = vshll.u32 %v392, 16
      %v400 = vrot.slane %v398, 1
      %v401 = vor.u32 %v396, %v400
      %v403 = vshll.u32 %v393, 16
      %v405 = vrot.slane %v403, 1
      %v406 = vsel %vm394, %v401, %v405
      %v415 = vunpack.c.l.b16 %v378
      %v416 = vunpack.c.l.b16 %v379
      %v417 = vunpack.c.l.b16 %v380
      %v418 = vunpack.c.l.b16 %v381
      %v419 = vunpack.c.l.b16 %v382
      %v420 = vunpack.c.l.b16 %v383
      %v421 = vunpack.c.l.b16 %v384
      %v422 = vunpack.c.l.b16 %v385
      %v423 = vpack.c.b16 %v416, %v415
      %v424 = vpack.c.b16 %v418, %v417
      %v425 = vpack.c.b16 %v420, %v419
      %v426 = vpack.c.b16 %v422, %v421
      %vm431 = vcmask 523264
      %v433 = vsel %vm431, %v406, 0
      %435 = vmatpush.bf16.msra.mxu0 0
      %436 = vmatpush.bf16.msra.mxu0 0
      %437 = vmatpush.bf16.msra.mxu0 0
      %438 = vmatpush.bf16.msra.mxu0 0
      %439 = vmatpush.bf16.msra.mxu0 %v426
      %440 = vmatpush.bf16.msra.mxu0 %v425
      %441 = vmatpush.bf16.msra.mxu0 %v424
      %442 = vmatpush.bf16.msra.mxu0 %v423
      %443 = vmatmul.bf16.gmra.mxu0 %v433
      %v444 = vpop.f32.mrf.mxu0
      %v445 = vadd.f32 0.0, %v444
      %v446 = vpop.f32.mrf.mxu0
      %v447 = vadd.f32 0.0, %v446
      %448 = vdwg.mxu0
      %v457 = vunpack.c.l.b16 %v368
      %v458 = vunpack.c.l.b16 %v369
      %v459 = vunpack.c.l.b16 %v370
      %v460 = vunpack.c.l.b16 %v371
      %v461 = vunpack.c.l.b16 %v372
      %v462 = vunpack.c.l.b16 %v373
      %v463 = vunpack.c.l.b16 %v374
      %v464 = vunpack.c.l.b16 %v375
      %v465 = vpack.c.b16 %v458, %v457
      %v466 = vpack.c.b16 %v460, %v459
      %v467 = vpack.c.b16 %v462, %v461
      %v468 = vpack.c.b16 %v464, %v463
      %v473 = vsel %vm431, %v392, 0
      %475 = vmatpush.bf16.msra.mxu0 0
      %476 = vmatpush.bf16.msra.mxu0 0
      %477 = vmatpush.bf16.msra.mxu0 0
      %478 = vmatpush.bf16.msra.mxu0 0
      %479 = vmatpush.bf16.msra.mxu0 %v468
      %480 = vmatpush.bf16.msra.mxu0 %v467
      %481 = vmatpush.bf16.msra.mxu0 %v466
      %482 = vmatpush.bf16.msra.mxu0 %v465
      %483 = vmatmul.bf16.gmra.mxu0 %v473
      %v484 = vpop.f32.mrf.mxu0
      %v485 = vadd.f32 %v445, %v484
      %v486 = vpop.f32.mrf.mxu0
      %v487 = vadd.f32 %v447, %v486
      %488 = vdwg.mxu0
      %v489 = vld [vmem:[#allocation2] sm:$0xe]
      %s490 = scalar_lea.vmem %s1, 64
      %v491 = vld [vmem:[%s490] sm:$0xf]
      %v492 = vld [vmem:[%s490 + $0x4] sm:$0xf]
      %v493 = vld [vmem:[%s490 + $0x8] sm:$0xf]
      %v494 = vld [vmem:[%s490 + $0xc] sm:$0xf]
      %v495 = vld [vmem:[%s490 + $0x10] sm:$0xf]
      %v496 = vld [vmem:[%s490 + $0x14] sm:$0xf]
      %v497 = vld [vmem:[%s490 + $0x18] sm:$0xf]
      %v498 = vld [vmem:[%s490 + $0x1c] sm:$0xf]
      %v500 = vunpack.c.l.b16 %v489
      %v501 = vpack.c.b16 %v390, %v500
      %vm502 = vcmask 1046528
      %v503 = vrot.slane %v501, 1
      %v504 = vrot.slane %v393, 1
      %v505 = vsel %vm502, %v503, %v504
      %v514 = vunpack.c.l.b16 %v491
      %v515 = vunpack.c.l.b16 %v492
      %v516 = vunpack.c.l.b16 %v493
      %v517 = vunpack.c.l.b16 %v494
      %v518 = vunpack.c.l.b16 %v495
      %v519 = vunpack.c.l.b16 %v496
      %v520 = vunpack.c.l.b16 %v497
      %v521 = vunpack.c.l.b16 %v498
      %v522 = vpack.c.b16 %v515, %v514
      %v523 = vpack.c.b16 %v517, %v516
      %v524 = vpack.c.b16 %v519, %v518
      %v525 = vpack.c.b16 %v521, %v520
      %v531 = vsel %vm431, %v505, 0
      %533 = vmatpush.bf16.msra.mxu0 0
      %534 = vmatpush.bf16.msra.mxu0 0
      %535 = vmatpush.bf16.msra.mxu0 0
      %536 = vmatpush.bf16.msra.mxu0 0
      %537 = vmatpush.bf16.msra.mxu0 %v525
      %538 = vmatpush.bf16.msra.mxu0 %v524
      %539 = vmatpush.bf16.msra.mxu0 %v523
      %540 = vmatpush.bf16.msra.mxu0 %v522
      %541 = vmatmul.bf16.gmra.mxu0 %v531
      %v542 = vpop.f32.mrf.mxu0
      %v543 = vadd.f32 0.0, %v542
      %v544 = vpop.f32.mrf.mxu0
      %v545 = vadd.f32 0.0, %v544
      %546 = vdwg.mxu0
      %v547 = vadd.f32 %v485, %v543
      %v548 = vadd.f32 %v487, %v545
      %v549 = vld [vmem:[%s2] sm:$0x1]
      %v551 = vperm.slane %v549, 0
      %v553 = vadd.f32 %v547, %v551
      %v554 = vadd.f32 %v548, %v551
      %555 = vst [vmem:[%s312] sm:$0xff] %v553
      %556 = vst [vmem:[%s312 + $0x8] sm:$0xff] %v554
      %v557 = vmax.f32 %v553, 0.0
      %v558 = vmax.f32 %v554, 0.0
      %v559 = vpack.c.bf16 %v558, %v557
      %v560 = vld [vmem:[%s3] sm:$0xf]
      %v561 = vld [vmem:[%s3 + $0x4] sm:$0xf]
      %v562 = vld [vmem:[%s3 + $0x8] sm:$0xf]
      %v563 = vld [vmem:[%s3 + $0xc] sm:$0xf]
      %v564 = vld [vmem:[%s3 + $0x10] sm:$0xf]
      %v565 = vld [vmem:[%s3 + $0x14] sm:$0xf]
      %v566 = vld [vmem:[%s3 + $0x18] sm:$0xf]
      %v567 = vld [vmem:[%s3 + $0x1c] sm:$0xf]
      %v568 = vld [vmem:[%s3 + $0x20] sm:$0xf]
      %v569 = vld [vmem:[%s3 + $0x24] sm:$0xf]
      %v570 = vld [vmem:[%s3 + $0x28] sm:$0xf]
      %v571 = vld [vmem:[%s3 + $0x2c] sm:$0xf]
      %v572 = vld [vmem:[%s3 + $0x30] sm:$0xf]
      %v573 = vld [vmem:[%s3 + $0x34] sm:$0xf]
      %v574 = vld [vmem:[%s3 + $0x38] sm:$0xf]
      %v575 = vld [vmem:[%s3 + $0x3c] sm:$0xf]
      %v592 = vunpack.c.l.b16 %v560
      %v593 = vunpack.c.l.b16 %v561
      %v594 = vunpack.c.l.b16 %v562
      %v595 = vunpack.c.l.b16 %v563
      %v596 = vunpack.c.l.b16 %v564
      %v597 = vunpack.c.l.b16 %v565
      %v598 = vunpack.c.l.b16 %v566
      %v599 = vunpack.c.l.b16 %v567
      %v600 = vunpack.c.l.b16 %v568
      %v601 = vunpack.c.l.b16 %v569
      %v602 = vunpack.c.l.b16 %v570
      %v603 = vunpack.c.l.b16 %v571
      %v604 = vunpack.c.l.b16 %v572
      %v605 = vunpack.c.l.b16 %v573
      %v606 = vunpack.c.l.b16 %v574
      %v607 = vunpack.c.l.b16 %v575
      %v608 = vpack.c.b16 %v593, %v592
      %v609 = vpack.c.b16 %v595, %v594
      %v610 = vpack.c.b16 %v597, %v596
      %v611 = vpack.c.b16 %v599, %v598
      %v612 = vpack.c.b16 %v601, %v600
      %v613 = vpack.c.b16 %v603, %v602
      %v614 = vpack.c.b16 %v605, %v604
      %v615 = vpack.c.b16 %v607, %v606
      %624 = vmatpush.bf16.msra.mxu0 %v615
      %625 = vmatpush.bf16.msra.mxu0 %v614
      %626 = vmatpush.bf16.msra.mxu0 %v613
      %627 = vmatpush.bf16.msra.mxu0 %v612
      %628 = vmatpush.bf16.msra.mxu0 %v611
      %629 = vmatpush.bf16.msra.mxu0 %v610
      %630 = vmatpush.bf16.msra.mxu0 %v609
      %631 = vmatpush.bf16.msra.mxu0 %v608
      %632 = vmatmul.bf16.gmra.mxu0 %v559
      %v633 = vpop.f32.mrf.mxu0
      %v634 = vadd.f32 0.0, %v633
      %v635 = vpop.f32.mrf.mxu0
      %v636 = vadd.f32 0.0, %v635
      %637 = vdwg.mxu0
      %v638 = vpack.c.bf16 %v636, %v634
      %v639 = vld [vmem:[%s4] sm:$0xf]
      %vm640 = vcmask 130048
      %v642 = vsel %vm640, %v639, 0
      %644 = vmatpush.bf16.msra.mxu0 0
      %645 = vmatpush.bf16.msra.mxu0 0
      %646 = vmatpush.bf16.msra.mxu0 0
      %647 = vmatpush.bf16.msra.mxu0 0
      %648 = vmatpush.bf16.msra.mxu0 0
      %649 = vmatpush.bf16.msra.mxu0 0
      %650 = vmatpush.bf16.msra.mxu0 0
      %651 = vmatpush.bf16.msra.mxu0 %v638
      %652 = vmatmul.bf16.gmra.mxu0 %v642
      %v653 = vpop.f32.mrf.mxu0
      %v654 = vadd.f32 0.0, %v653
      %v655 = vpop.f32.mrf.mxu0
      %656 = vdwg.mxu0
      %v657 = vpack.c.bf16 %v654, %v654
      %v658 = vld [vmem:[#allocation3] sm:$0x1]
      %v659 = vsel %vm325, 0, %v658
      %660 = vst [vmem:[#allocation3] sm:$0x1] %v659
      %v661 = vld [vmem:[#allocation3 + $0x4] sm:$0x1]
      %v662 = vsel %vm330, 0, %v661
      %663 = vst [vmem:[#allocation3 + $0x4] sm:$0x1] %v662
      %v665 = vshrl.u32 %v657, 16
      %v667 = vrot.slane %v665, 7
      %v668 = vshll.u32 %v657, 16
      %v670 = vor.u32 %v667, %v668
      %v671 = vrot.slane %v667, 4
      %v674 = vld [vmem:[#allocation3] sm:$0xf]
      %v675 = vsel %vm357, %v670, %v674
      %676 = vst [vmem:[#allocation3] sm:$0xf] %v675
      %v677 = vld [vmem:[#allocation3 + $0x4] sm:$0x1]
      %v678 = vsel %vm325, %v671, %v677
      %679 = vst [vmem:[#allocation3 + $0x4] sm:$0x1] %v678
      %v680 = vld [vmem:[#allocation3] sm:$0xf]
      %v681 = vld [vmem:[%s5] sm:$0xf]
      %v682 = vld [vmem:[%s5 + $0x4] sm:$0xf]
      %v683 = vld [vmem:[%s5 + $0x8] sm:$0xf]
      %v684 = vld [vmem:[%s5 + $0xc] sm:$0xf]
      %v685 = vld [vmem:[%s5 + $0x10] sm:$0xf]
      %v686 = vld [vmem:[%s5 + $0x14] sm:$0xf]
      %v687 = vld [vmem:[%s5 + $0x18] sm:$0xf]
      %v688 = vld [vmem:[%s5 + $0x1c] sm:$0xf]
      %v689 = vld [vmem:[#allocation3 + $0x4] sm:$0x1]
      %s690 = scalar_lea.vmem %s5, 32
      %v691 = vld [vmem:[%s690] sm:$0xf]
      %v692 = vld [vmem:[%s690 + $0x4] sm:$0xf]
      %v693 = vld [vmem:[%s690 + $0x8] sm:$0xf]
      %v694 = vld [vmem:[%s690 + $0xc] sm:$0xf]
      %v695 = vld [vmem:[%s690 + $0x10] sm:$0xf]
      %v696 = vld [vmem:[%s690 + $0x14] sm:$0xf]
      %v697 = vld [vmem:[%s690 + $0x18] sm:$0xf]
      %v698 = vld [vmem:[%s690 + $0x1c] sm:$0xf]
      %v701 = vunpack.c.l.b16 %v680
      %v702 = vunpack.c.l.b16 %v689
      %v703 = vpack.c.b16 %v702, %v701
      %v705 = vshrl.u32 %v703, 16
      %v707 = vshll.u32 %v703, 16
      %v709 = vrot.slane %v707, 1
      %v710 = vor.u32 %v705, %v709
      %v719 = vunpack.c.l.b16 %v691
      %v720 = vunpack.c.l.b16 %v692
      %v721 = vunpack.c.l.b16 %v693
      %v722 = vunpack.c.l.b16 %v694
      %v723 = vunpack.c.l.b16 %v695
      %v724 = vunpack.c.l.b16 %v696
      %v725 = vunpack.c.l.b16 %v697
      %v726 = vunpack.c.l.b16 %v698
      %v727 = vpack.c.b16 %v720, %v719
      %v728 = vpack.c.b16 %v722, %v721
      %v729 = vpack.c.b16 %v724, %v723
      %v730 = vpack.c.b16 %v726, %v725
      %v736 = vsel %vm431, %v710, 0
      %738 = vmatpush.bf16.msra.mxu0 0
      %739 = vmatpush.bf16.msra.mxu0 0
      %740 = vmatpush.bf16.msra.mxu0 0
      %741 = vmatpush.bf16.msra.mxu0 0
      %742 = vmatpush.bf16.msra.mxu0 %v730
      %743 = vmatpush.bf16.msra.mxu0 %v729
      %744 = vmatpush.bf16.msra.mxu0 %v728
      %745 = vmatpush.bf16.msra.mxu0 %v727
      %746 = vmatmul.bf16.gmra.mxu0 %v736
      %v747 = vpop.f32.mrf.mxu0
      %v748 = vadd.f32 0.0, %v747
      %v749 = vpop.f32.mrf.mxu0
      %750 = vdwg.mxu0
      %v759 = vunpack.c.l.b16 %v681
      %v760 = vunpack.c.l.b16 %v682
      %v761 = vunpack.c.l.b16 %v683
      %v762 = vunpack.c.l.b16 %v684
      %v763 = vunpack.c.l.b16 %v685
      %v764 = vunpack.c.l.b16 %v686
      %v765 = vunpack.c.l.b16 %v687
      %v766 = vunpack.c.l.b16 %v688
      %v767 = vpack.c.b16 %v760, %v759
      %v768 = vpack.c.b16 %v762, %v761
      %v769 = vpack.c.b16 %v764, %v763
      %v770 = vpack.c.b16 %v766, %v765
      %v776 = vsel %vm431, %v680, 0
      %778 = vmatpush.bf16.msra.mxu0 0
      %779 = vmatpush.bf16.msra.mxu0 0
      %780 = vmatpush.bf16.msra.mxu0 0
      %781 = vmatpush.bf16.msra.mxu0 0
      %782 = vmatpush.bf16.msra.mxu0 %v770
      %783 = vmatpush.bf16.msra.mxu0 %v769
      %784 = vmatpush.bf16.msra.mxu0 %v768
      %785 = vmatpush.bf16.msra.mxu0 %v767
      %786 = vmatmul.bf16.gmra.mxu0 %v776
      %v787 = vpop.f32.mrf.mxu0
      %v788 = vadd.f32 %v748, %v787
      %v789 = vpop.f32.mrf.mxu0
      %790 = vdwg.mxu0
      %v791 = vld [vmem:[#allocation3] sm:$0xe]
      %s792 = scalar_lea.vmem %s5, 64
      %v793 = vld [vmem:[%s792] sm:$0xf]
      %v794 = vld [vmem:[%s792 + $0x4] sm:$0xf]
      %v795 = vld [vmem:[%s792 + $0x8] sm:$0xf]
      %v796 = vld [vmem:[%s792 + $0xc] sm:$0xf]
      %v797 = vld [vmem:[%s792 + $0x10] sm:$0xf]
      %v798 = vld [vmem:[%s792 + $0x14] sm:$0xf]
      %v799 = vld [vmem:[%s792 + $0x18] sm:$0xf]
      %v800 = vld [vmem:[%s792 + $0x1c] sm:$0xf]
      %v802 = vunpack.c.l.b16 %v791
      %v803 = vpack.c.b16 %v702, %v802
      %v804 = vrot.slane %v803, 1
      %v813 = vunpack.c.l.b16 %v793
      %v814 = vunpack.c.l.b16 %v794
      %v815 = vunpack.c.l.b16 %v795
      %v816 = vunpack.c.l.b16 %v796
      %v817 = vunpack.c.l.b16 %v797
      %v818 = vunpack.c.l.b16 %v798
      %v819 = vunpack.c.l.b16 %v799
      %v820 = vunpack.c.l.b16 %v800
      %v821 = vpack.c.b16 %v814, %v813
      %v822 = vpack.c.b16 %v816, %v815
      %v823 = vpack.c.b16 %v818, %v817
      %v824 = vpack.c.b16 %v820, %v819
      %v830 = vsel %vm431, %v804, 0
      %832 = vmatpush.bf16.msra.mxu0 0
      %833 = vmatpush.bf16.msra.mxu0 0
      %834 = vmatpush.bf16.msra.mxu0 0
      %835 = vmatpush.bf16.msra.mxu0 0
      %836 = vmatpush.bf16.msra.mxu0 %v824
      %837 = vmatpush.bf16.msra.mxu0 %v823
      %838 = vmatpush.bf16.msra.mxu0 %v822
      %839 = vmatpush.bf16.msra.mxu0 %v821
      %840 = vmatmul.bf16.gmra.mxu0 %v830
      %v841 = vpop.f32.mrf.mxu0
      %v842 = vadd.f32 0.0, %v841
      %v843 = vpop.f32.mrf.mxu0
      %844 = vdwg.mxu0
      %v845 = vadd.f32 %v788, %v842
      %v846 = vld [vmem:[%s6] sm:$0x1]
      %v848 = vperm.slane %v846, 0
      %v850 = vadd.f32 %v845, %v848
      %851 = vst.msk [vmem:[%s317] sm:$0xff] %vm431, %v850
      %s852 = smul.u32 2, %s20
      %p853 = scmp.lt.s32.totalorder %s852, 3
      %s854 = scalar_select %p853, %s852, 3
      %s855 = smul.addr %s854, 8
      %s856 = scalar_lea.vmem %s7, %s855
      %p857 = scmp.lt.s32.totalorder %s20, 1
      %s858 = scalar_select %p857, %s20, 1
      %s859 = smul.addr %s858, 8
      %s860 = scalar_lea.vmem %s8, %s859
      // Predicated region
      $region49: #{_forward_impl.1} parent=47 // pred_check
        %p861 = pneg %p190
      $region50: #{_forward_impl.1} parent=47 // pred_check_branch
        %863 = sbr.rel (%p861) target = $region52
      $region51: #{_forward_impl.1} parent=47 // pred_region
        %s864 = smul.u32 2, %s20
      $region52: #{_forward_impl.1} parent=47 // pred_fallthru
        _
      // Predicated region
      $region53: #{_forward_impl.1} parent=47 // pred_check
        %p865 = pneg %p216
      $region54: #{_forward_impl.1} parent=47 // pred_check_branch
        %867 = sbr.rel (%p865) target = $region56
      $region55: #{_forward_impl.1} parent=47 // pred_region
        _
      $region56: #{_forward_impl.1} parent=47 // pred_fallthru
        _
    $region48: #{_forward_impl.1} parent=5 // pred_fallthru
      _
    %p868 = scmp.le.s32.totalorder 2, %s15
    // Predicated region
    $region57: #{_forward_impl.1} parent=5 // pred_check
      %p869 = pneg %p868
    $region58: #{_forward_impl.1} parent=5 // pred_check_branch
      %871 = sbr.rel (%p869) target = $region60
    $region59: #{_forward_impl.1} parent=5 // pred_region
      %s872 = ssub.s32 %s15, 2
      // Predicated region
      $region61: #{_forward_impl.1} parent=59 // pred_check
        %p873 = pneg %p196
      $region62: #{_forward_impl.1} parent=59 // pred_check_branch
        %875 = sbr.rel (%p873) target = $region64
      $region63: #{_forward_impl.1} parent=59 // pred_region
        %s876 = smul.u32 2, %s21
        %p877 = scmp.lt.s32.totalorder %s876, 3
        %s878 = scalar_select %p877, %s876, 3
        %s879 = smul.addr %s878, 8
        %s880 = scalar_lea.vmem %s7, %s879
      $region64: #{_forward_impl.1} parent=59 // pred_fallthru
        _
      // Predicated region
      $region65: #{_forward_impl.1} parent=59 // pred_check
        %p881 = pneg %p222
      $region66: #{_forward_impl.1} parent=59 // pred_check_branch
        %883 = sbr.rel (%p881) target = $region68
      $region67: #{_forward_impl.1} parent=59 // pred_region
        %p884 = scmp.lt.s32.totalorder %s21, 1
        %s885 = scalar_select %p884, %s21, 1
        %s886 = smul.addr %s885, 8
        %s887 = scalar_lea.vmem %s8, %s886
      $region68: #{_forward_impl.1} parent=59 // pred_fallthru
        _
    $region60: #{_forward_impl.1} parent=5 // pred_fallthru
      _
  $region6: #{_forward_impl.1} parent=0 // loop_footer
    %s19 = sadd.s32 1, %s15
  $region7: #{_forward_impl.1} parent=0 // loop_footer_branch
    %14 = sbr.rel target = $region3
  $region8: #{_forward_impl.1} parent=0 // loop_exit
    _

</llo_original>
